<compile_context>
chip_gen: v6e
topology: v6e:2x2x1
jax: 0.10.0
libtpu: 0.0.40
codegen_flags: <defaults>
</compile_context>

<pallas_src>
import jax
import jax.numpy as jnp
from jax.experimental import pallas as pl
from jax.experimental.pallas import tpu as pltpu


# ---------------------------------------------------------------------------
# Pass 1: fused f/g/h 1x1 projections (one (3C, C) bf16 matmul per x tile).
# ---------------------------------------------------------------------------
def _proj_kernel(x_ref, w_ref, b_ref, f_ref, g_ref, h_ref):
    # x_ref: (1, C, tn) f32    w_ref: (3C, C) bf16 (rows = [wf; wg; wh])
    # b_ref: (3C, 1)  f32      f/g/h_ref: (1, C, tn) bf16
    c = x_ref.shape[1]
    x = x_ref[0].astype(jnp.bfloat16)                                # (C, tn)
    fgh = jnp.dot(w_ref[...], x, preferred_element_type=jnp.float32)
    fgh = fgh + b_ref[...]                                           # (3C, tn) f32
    f_ref[0] = fgh[:c].astype(f_ref.dtype)
    g_ref[0] = fgh[c:2 * c].astype(g_ref.dtype)
    h_ref[0] = fgh[2 * c:].astype(h_ref.dtype)


# ---------------------------------------------------------------------------
# Pass 2: flash-style attention (online softmax) + fused out_conv + residual.
# ---------------------------------------------------------------------------
def _flash_attn_kernel(f_ref, g_ref, h_ref, x_ref, wo_ref, bo_ref, o_ref,
                       m_ref, l_ref, acc_ref):
    # f_ref:  (1, C, tq)  bf16   query-tile projection (channels-first)
    # g_ref:  (1, tk, C)  bf16   key-tile projection   (N-major -> plain NN matmul)
    # h_ref:  (1, C, tk)  bf16   value-tile projection (channels-first)
    # x_ref:  (1, C, tq)  f32    residual input
    # wo_ref: (C, C) f32         bo_ref: (C, 1) f32
    # o_ref:  (1, C, tq)  f32    lane-dense output tile
    # scratch: m_ref (1, tq) f32, l_ref (1, tq) f32, acc_ref (C, tq) f32
    ki = pl.program_id(2)
    nk = pl.num_programs(2)

    @pl.when(ki == 0)
    def _init():
        m_ref[...] = jnp.full(m_ref.shape, -jnp.inf, m_ref.dtype)
        l_ref[...] = jnp.zeros(l_ref.shape, l_ref.dtype)
        acc_ref[...] = jnp.zeros(acc_ref.shape, acc_ref.dtype)

    f = f_ref[0]                                                     # (C, tq)
    g = g_ref[0]                                                     # (tk, C)
    h = h_ref[0]                                                     # (C, tk)

    # S^T[j, i] = <g_j, f_i>  -> (tk, tq); bf16 MXU operands, f32 accumulation.
    st = jnp.dot(g, f, preferred_element_type=jnp.float32)

    # Online softmax over the KV axis (axis 0 of st); all statistics in f32.
    m_prev = m_ref[...]                                              # (1, tq)
    m_new = jnp.maximum(m_prev, jnp.max(st, axis=0, keepdims=True))
    alpha = jnp.exp(m_prev - m_new)                                  # (1, tq)
    p = jnp.exp(st - m_new)                                          # (tk, tq) f32
    l_ref[...] = alpha * l_ref[...] + jnp.sum(p, axis=0, keepdims=True)
    acc_ref[...] = alpha * acc_ref[...] + jnp.dot(
        h, p.astype(jnp.bfloat16), preferred_element_type=jnp.float32)  # (C, tq)
    m_ref[...] = m_new

    @pl.when(ki == nk - 1)
    def _finalize():
        inv_l = pl.reciprocal(l_ref[...], approx=True)               # EUP slot
        attn = acc_ref[...] * inv_l                                  # (C, tq) f32
        out = jnp.dot(wo_ref[...], attn,
                      preferred_element_type=jnp.float32) + bo_ref[...]
        o_ref[0] = (out + x_ref[0]).astype(o_ref.dtype)


# ---------------------------------------------------------------------------
# Wrapper
# ---------------------------------------------------------------------------
def _pick_tile(n):
    for t in (512, 256, 128):
        if n % t == 0:
            return t
    return n


def _vmem_limit(estimate_bytes):
    # 2x headroom over the estimated working set, clamped to [16 MiB, 64 MiB]
    # (64 MiB = v7x physical VMEM per TensorCore).
    return int(min(max(2 * estimate_bytes, 16 * 2**20), 64 * 2**20))


def self_attention_pallas(x_nchw, params, *, tn=None, tq=None, tk=None):
    """SAGAN-style self attention.  x_nchw: (B, C, H, W) f32.

    params: 1x1-conv weights "wf","wg","wh","wo" with PyTorch (C_out, C_in)
    layout and biases "bf","bg","bh","bo" of shape (C,).
    """
    B, C, H, W = x_nchw.shape
    N = H * W
    f32, bf16 = jnp.float32, jnp.bfloat16

    x_t = x_nchw.reshape(B, C, N)            # NCHW view; no data movement.

    tn = tn or _pick_tile(N)
    tq = tq or _pick_tile(N)
    tk = tk or _pick_tile(N)
    assert N % tn == 0 and N % tq == 0 and N % tk == 0, (N, tn, tq, tk)

    # Fused projection weight/bias: f, g, h stacked along the output-channel axis.
    w_fgh = jnp.concatenate(
        [params["wf"], params["wg"], params["wh"]], axis=0).astype(bf16)   # (3C, C)
    b_fgh = jnp.concatenate(
        [params["bf"], params["bg"], params["bh"]]).reshape(3 * C, 1).astype(f32)
    wo = params["wo"].astype(f32)                                          # (C, C)
    bo = params["bo"].reshape(C, 1).astype(f32)

    # -------- Pass 1: f/g/h projections, once per batch element --------
    proj_vmem = (2 * (C * tn * 4 + 3 * C * C * 2 + 3 * C * 4 + 3 * C * tn * 2)
                 + 3 * C * tn * 4 + C * tn * 2)
    f_c, g_c, h_c = pl.pallas_call(
        _proj_kernel,
        out_shape=(jax.ShapeDtypeStruct((B, C, N), bf16),
                   jax.ShapeDtypeStruct((B, C, N), bf16),
                   jax.ShapeDtypeStruct((B, C, N), bf16)),
        grid_spec=pltpu.PrefetchScalarGridSpec(
            num_scalar_prefetch=0,
            grid=(B, N // tn),
            in_specs=[pl.BlockSpec((1, C, tn), lambda b, n: (b, 0, n)),
                      pl.BlockSpec((3 * C, C), lambda b, n: (0, 0)),
                      pl.BlockSpec((3 * C, 1), lambda b, n: (0, 0))],
            out_specs=(pl.BlockSpec((1, C, tn), lambda b, n: (b, 0, n)),
                       pl.BlockSpec((1, C, tn), lambda b, n: (b, 0, n)),
                       pl.BlockSpec((1, C, tn), lambda b, n: (b, 0, n))),
        ),
        compiler_params=pltpu.CompilerParams(
            dimension_semantics=("parallel", "parallel"),
            vmem_limit_bytes=_vmem_limit(proj_vmem)),
    )(x_t, w_fgh, b_fgh)

    # Tiny XLA transpose of g only (B*N*C bf16): keeps every in-kernel matmul a
    # plain non-transposed NN MXU matmul.  x and the output are never transposed.
    g_t = jnp.transpose(g_c, (0, 2, 1))                                   # (B, N, C)

    # -------- Pass 2: flash attention + out_conv + residual --------
    attn_vmem = (2 * (C * tq * 2 + tk * C * 2 + C * tk * 2 + C * tq * 4
                      + C * C * 4 + C * 4 + C * tq * 4)
                 + C * tq * 4 + 2 * tq * 4          # acc, m, l scratch
                 + 12 * tq * tk)                    # live (tk, tq) temps
    out_t = pl.pallas_call(
        _flash_attn_kernel,
        out_shape=jax.ShapeDtypeStruct((B, C, N), x_t.dtype),
        grid_spec=pltpu.PrefetchScalarGridSpec(
            num_scalar_prefetch=0,
            grid=(B, N // tq, N // tk),
            in_specs=[pl.BlockSpec((1, C, tq), lambda b, qi, ki: (b, 0, qi)),   # f
                      pl.BlockSpec((1, tk, C), lambda b, qi, ki: (b, ki, 0)),   # g
                      pl.BlockSpec((1, C, tk), lambda b, qi, ki: (b, 0, ki)),   # h
                      pl.BlockSpec((1, C, tq), lambda b, qi, ki: (b, 0, qi)),   # x
                      pl.BlockSpec((C, C), lambda b, qi, ki: (0, 0)),           # wo
                      pl.BlockSpec((C, 1), lambda b, qi, ki: (0, 0))],          # bo
            out_specs=pl.BlockSpec((1, C, tq), lambda b, qi, ki: (b, 0, qi)),
            scratch_shapes=[pltpu.VMEM((1, tq), f32),     # running max m
                            pltpu.VMEM((1, tq), f32),     # running sum l
                            pltpu.VMEM((C, tq), f32)],    # output accumulator
        ),
        compiler_params=pltpu.CompilerParams(
            dimension_semantics=("parallel", "parallel", "arbitrary"),
            vmem_limit_bytes=_vmem_limit(attn_vmem)),
    )(f_c, g_t, h_c, x_t, wo, bo)

    return out_t.reshape(B, C, H, W)


# ---------------------------------------------------------------------------
# References
# ---------------------------------------------------------------------------
def self_attention_ref(x_nchw, params):
    """Pure-f32 JAX reference mirroring the PyTorch forward exactly."""
    B, C, H, W = x_nchw.shape
    N = H * W
    xf = x_nchw.reshape(B, C, N)

    def conv1x1(w, b):
        return jnp.einsum("oc,bcn->bon", w, xf) + b[None, :, None]

    F = conv1x1(params["wf"], params["bf"])
    G = conv1x1(params["wg"], params["bg"])
    Hh = conv1x1(params["wh"], params["bh"])
    S = jnp.einsum("bci,bcj->bij", F, G)                  # S[i, j] = <f_i, g_j>
    P = jax.nn.softmax(S, axis=-1)
    O = jnp.einsum("bcj,bij->bci", Hh, P)
    O = jnp.einsum("oc,bcn->bon", params["wo"], O) + params["bo"][None, :, None]
    return (O + xf).reshape(B, C, H, W)


def self_attention_bf16_ref(x_nchw, params):
    """f32 reference with the same bf16 rounding points as the Pallas kernels."""
    B, C, H, W = x_nchw.shape
    N = H * W
    bf16, f32 = jnp.bfloat16, jnp.float32
    x_t = x_nchw.reshape(B, C, N)
    w_fgh = jnp.concatenate([params["wf"], params["wg"], params["wh"]], axis=0)
    b_fgh = jnp.concatenate([params["bf"], params["bg"], params["bh"]])
    fgh = jnp.einsum("oc,bcn->bon",
                     w_fgh.astype(bf16).astype(f32),
                     x_t.astype(bf16).astype(f32)) + b_fgh[None, :, None]
    fgh = fgh.astype(bf16).astype(f32)
    f, g, h = fgh[:, :C], fgh[:, C:2 * C], fgh[:, 2 * C:]
    S = jnp.einsum("bci,bcj->bij", f, g)
    P = jax.nn.softmax(S, axis=-1).astype(bf16).astype(f32)
    O = jnp.einsum("bcj,bij->bci", h, P)
    O = jnp.einsum("oc,bcn->bon", params["wo"], O) + params["bo"][None, :, None]
    return (O + x_t).reshape(B, C, H, W)


if __name__ == "__main__":
    B, C, H, W = 2, 4, 16, 16
    key = jax.random.PRNGKey(0)
    keys = jax.random.split(key, 9)

    bound = 1.0 / (C ** 0.5)
    params = {
        "wf": jax.random.uniform(keys[0], (C, C), jnp.float32, -bound, bound),
        "bf": jax.random.uniform(keys[1], (C,), jnp.float32, -bound, bound),
        "wg": jax.random.uniform(keys[2], (C, C), jnp.float32, -bound, bound),
        "bg": jax.random.uniform(keys[3], (C,), jnp.float32, -bound, bound),
        "wh": jax.random.uniform(keys[4], (C, C), jnp.float32, -bound, bound),
        "bh": jax.random.uniform(keys[5], (C,), jnp.float32, -bound, bound),
        "wo": jax.random.uniform(keys[6], (C, C), jnp.float32, -bound, bound),
        "bo": jax.random.uniform(keys[7], (C,), jnp.float32, -bound, bound),
    }
    x = jax.random.normal(keys[8], (B, C, H, W), jnp.float32)

    # Explicit 128-tiles so the run exercises the multi-tile online-softmax /
    # pipelined paths (N=256 -> 2x2 q/kv tiles); defaults pick larger tiles.
    out = jax.block_until_ready(
        self_attention_pallas(x, params, tn=128, tq=128, tk=128))

    ref_match = jax.block_until_ready(self_attention_bf16_ref(x, params))
    ref_f32 = jax.block_until_ready(self_attention_ref(x, params))

    assert out.shape == (B, C, H, W)
    err_match = float(jnp.max(jnp.abs(out - ref_match)))
    err_f32 = float(jnp.max(jnp.abs(out - ref_f32)))
    assert err_match < 1e-1, f"max abs err vs bf16-matched ref = {err_match}"
    assert err_f32 < 3e-1, f"max abs err vs f32 ref = {err_f32}"
    print("KERNEL_OK")
</pallas_src>

<mosaic_0001>
module attributes {stable_mosaic.version = 11 : i64} {
  func.func @_proj_kernel(%arg0: i32, %arg1: i32, %arg2: memref<1x4x128xf32, #tpu.memory_space<vmem>>, %arg3: memref<12x4xbf16, #tpu.memory_space<vmem>>, %arg4: memref<12x1xf32, #tpu.memory_space<vmem>>, %arg5: memref<1x4x128xbf16, #tpu.memory_space<vmem>>, %arg6: memref<1x4x128xbf16, #tpu.memory_space<vmem>>, %arg7: memref<1x4x128xbf16, #tpu.memory_space<vmem>>) attributes {dimension_semantics = [#tpu.dimension_semantics<parallel>, #tpu.dimension_semantics<parallel>], iteration_bounds = array<i64: 2, 2>, scalar_prefetch = 0 : i64, scratch_operands = 0 : i64, tpu.core_type = #tpu.core_type<tc>, window_params = [{transform_indices = @transform_0, window_bounds = array<i64: 1, 4, 128>}, {pipeline_mode = #tpu.pipeline_mode<synchronous>, transform_indices = @transform_1, window_bounds = array<i64: 12, 4>}, {pipeline_mode = #tpu.pipeline_mode<synchronous>, transform_indices = @transform_2, window_bounds = array<i64: 12, 1>}, {transform_indices = @transform_3, window_bounds = array<i64: 1, 4, 128>}, {transform_indices = @transform_4, window_bounds = array<i64: 1, 4, 128>}, {transform_indices = @transform_5, window_bounds = array<i64: 1, 4, 128>}]} {
    %c0 = arith.constant 0 : index
    %c0_0 = arith.constant 0 : index
    %c0_1 = arith.constant 0 : index
    %0 = vector.load %arg2[%c0, %c0_0, %c0_1] : memref<1x4x128xf32, #tpu.memory_space<vmem>>, vector<1x4x128xf32>
    %1 = vector.shape_cast %0 : vector<1x4x128xf32> to vector<4x128xf32>
    %2 = arith.truncf %1 : vector<4x128xf32> to vector<4x128xbf16>
    %c0_2 = arith.constant 0 : index
    %c0_3 = arith.constant 0 : index
    %3 = vector.load %arg3[%c0_2, %c0_3] : memref<12x4xbf16, #tpu.memory_space<vmem>>, vector<12x4xbf16>
    %cst = arith.constant dense<0.000000e+00> : vector<12x128xf32>
    %4 = tpu.matmul %3, %2, %cst {dimension_numbers = #tpu.dot_dimension_numbers<[1], [0], [0], [1], [0, 0, 1, 1], [], []>} : vector<12x4xbf16>, vector<4x128xbf16>, vector<12x128xf32> -> vector<12x128xf32>
    %c0_4 = arith.constant 0 : index
    %c0_5 = arith.constant 0 : index
    %5 = vector.load %arg4[%c0_4, %c0_5] : memref<12x1xf32, #tpu.memory_space<vmem>>, vector<12x1xf32>
    %6 = vector.broadcast %5 : vector<12x1xf32> to vector<12x128xf32>
    %7 = arith.addf %4, %6 : vector<12x128xf32>
    %8 = vector.extract_strided_slice %7 {offsets = [0, 0], sizes = [4, 128], strides = [1, 1]} : vector<12x128xf32> to vector<4x128xf32>
    %9 = arith.truncf %8 : vector<4x128xf32> to vector<4x128xbf16>
    %c0_6 = arith.constant 0 : index
    %c0_7 = arith.constant 0 : index
    %c0_8 = arith.constant 0 : index
    %10 = vector.load %arg5[%c0_6, %c0_7, %c0_8] : memref<1x4x128xbf16, #tpu.memory_space<vmem>>, vector<1x4x128xbf16>
    %11 = vector.shape_cast %10 : vector<1x4x128xbf16> to vector<4x128xbf16>
    %12 = vector.shape_cast %9 : vector<4x128xbf16> to vector<1x4x128xbf16>
    tpu.vector_store %arg5[%c0_6, %c0_7, %c0_8], %12 {strides = array<i32>} : memref<1x4x128xbf16, #tpu.memory_space<vmem>>, vector<1x4x128xbf16>,
    %13 = vector.extract_strided_slice %7 {offsets = [4, 0], sizes = [4, 128], strides = [1, 1]} : vector<12x128xf32> to vector<4x128xf32>
    %14 = arith.truncf %13 : vector<4x128xf32> to vector<4x128xbf16>
    %c0_9 = arith.constant 0 : index
    %c0_10 = arith.constant 0 : index
    %c0_11 = arith.constant 0 : index
    %15 = vector.load %arg6[%c0_9, %c0_10, %c0_11] : memref<1x4x128xbf16, #tpu.memory_space<vmem>>, vector<1x4x128xbf16>
    %16 = vector.shape_cast %15 : vector<1x4x128xbf16> to vector<4x128xbf16>
    %17 = vector.shape_cast %14 : vector<4x128xbf16> to vector<1x4x128xbf16>
    tpu.vector_store %arg6[%c0_9, %c0_10, %c0_11], %17 {strides = array<i32>} : memref<1x4x128xbf16, #tpu.memory_space<vmem>>, vector<1x4x128xbf16>,
    %18 = vector.extract_strided_slice %7 {offsets = [8, 0], sizes = [4, 128], strides = [1, 1]} : vector<12x128xf32> to vector<4x128xf32>
    %19 = arith.truncf %18 : vector<4x128xf32> to vector<4x128xbf16>
    %c0_12 = arith.constant 0 : index
    %c0_13 = arith.constant 0 : index
    %c0_14 = arith.constant 0 : index
    %20 = vector.load %arg7[%c0_12, %c0_13, %c0_14] : memref<1x4x128xbf16, #tpu.memory_space<vmem>>, vector<1x4x128xbf16>
    %21 = vector.shape_cast %20 : vector<1x4x128xbf16> to vector<4x128xbf16>
    %22 = vector.shape_cast %19 : vector<4x128xbf16> to vector<1x4x128xbf16>
    tpu.vector_store %arg7[%c0_12, %c0_13, %c0_14], %22 {strides = array<i32>} : memref<1x4x128xbf16, #tpu.memory_space<vmem>>, vector<1x4x128xbf16>,
    return
  }
  func.func @transform_0(%arg0: i32, %arg1: i32) -> (i32, i32, i32) {
    %c0_i32 = arith.constant 0 : i32
    %c0_i32_0 = arith.constant 0 : i32
    return %arg0, %c0_i32, %arg1 : i32, i32, i32
  }
  func.func @transform_1(%arg0: i32, %arg1: i32) -> (i32, i32) {
    %c0_i32 = arith.constant 0 : i32
    %c0_i32_0 = arith.constant 0 : i32
    %c0_i32_1 = arith.constant 0 : i32
    return %c0_i32, %c0_i32_0 : i32, i32
  }
  func.func @transform_2(%arg0: i32, %arg1: i32) -> (i32, i32) {
    %c0_i32 = arith.constant 0 : i32
    %c0_i32_0 = arith.constant 0 : i32
    %c0_i32_1 = arith.constant 0 : i32
    return %c0_i32, %c0_i32_0 : i32, i32
  }
  func.func @transform_3(%arg0: i32, %arg1: i32) -> (i32, i32, i32) {
    %c0_i32 = arith.constant 0 : i32
    %c0_i32_0 = arith.constant 0 : i32
    return %arg0, %c0_i32, %arg1 : i32, i32, i32
  }
  func.func @transform_4(%arg0: i32, %arg1: i32) -> (i32, i32, i32) {
    %c0_i32 = arith.constant 0 : i32
    %c0_i32_0 = arith.constant 0 : i32
    return %arg0, %c0_i32, %arg1 : i32, i32, i32
  }
  func.func @transform_5(%arg0: i32, %arg1: i32) -> (i32, i32, i32) {
    %c0_i32 = arith.constant 0 : i32
    %c0_i32_0 = arith.constant 0 : i32
    return %arg0, %c0_i32, %arg1 : i32, i32, i32
  }
}

</mosaic_0001>

<llo_original>
// kernel: tpu_custom_call.1
$region0: #{tpu_custom_call.1}
  #allocation0 [shape = 'u32[]', space=smem, size = 0x4, offset = 0x4, fixed_abs, tag = 'smem constant byte address 0x4 - core index']
  #allocation1 [shape = 'u32[144,128]{1,0:T(1,128)}', space=vmem, size = 0x12000, scoped, tag = 'internal scratch']
  %s0 = inlined_call_operand.vmem [shape: f32[2,4,256], index: 0, kind: input, shape index: {}]
  %s1 = inlined_call_operand.vmem [shape: bf16[12,4], index: 1, kind: input, shape index: {}]
  %s2 = inlined_call_operand.vmem [shape: f32[12,1], index: 2, kind: input, shape index: {}]
  %s3 = inlined_call_operand.hbm [shape: bf16[2,4,256], index: 3, kind: output, shape index: {0}]
  %s4 = inlined_call_operand.hbm [shape: bf16[2,4,256], index: 4, kind: output, shape index: {1}]
  %s5 = inlined_call_operand.hbm [shape: bf16[2,4,256], index: 5, kind: output, shape index: {2}]
  %6 = xla_tuple %s3, %s4, %s5
  %s7 = sld [smem:[#allocation0]]
  $region61: #{tpu_custom_call.1} parent=0
    _
  %s9 = ssub.s32 1, %s7
  %s10 = scalar_select 0, %s9, %s7
  $region1: #{tpu_custom_call.1} parent=0
    #allocation2 [shape = 'u8[2048]{0}', space=vmem, size = 0x800, scoped, tag = 'output window, operand 0']
    #allocation3 [shape = 's32[2]{0}', space=sflag, size = 0x8, scoped, tag = 'scoped memory for tpu_custom_call.1']
    #allocation4 [shape = 'u8[2048]{0}', space=vmem, size = 0x800, scoped, tag = 'output window, operand 1']
    #allocation5 [shape = 's32[2]{0}', space=sflag, size = 0x8, scoped, tag = 'scoped memory for tpu_custom_call.1']
    #allocation6 [shape = 'u8[2048]{0}', space=vmem, size = 0x800, scoped, tag = 'output window, operand 2']
    %11 = vsyncpa [#allocation3], 0
    %s12 = scalar_lea.sflag [#allocation3], 1
    %13 = vsyncpa %s12, 0
    %14 = vsyncpa [#allocation5], 0
    %s15 = scalar_lea.sflag [#allocation5], 1
    %16 = vsyncpa %s15, 0
    loop: start=0, step=1, limit=6
    $region2: #{tpu_custom_call.1} parent=1 // loop_pre_header
      _
    $region3: #{tpu_custom_call.1} parent=1 // loop_header
      %s18 = sphi 0, %s22
      %p19 = scmp.ge.s32.totalorder %s18, 6
      %s25 = sphi 0, %s37
      %s26 = sphi 0, %s33
      %s27 = sphi 0, %s25
      %s28 = sphi 0, %s26
      %s29 = sphi 0, %s27
      %s30 = sphi 0, %s28
      %s42 = sphi 0, %s44
      %s45 = sphi 0, %s42
      %s46 = sphi 0, %s45
      %s62 = sphi 0, %s46
      %s66 = sphi 0, %s66
      %s68 = sphi 0, %s66
      %s69 = sphi 0, %s68
      %s83 = sphi 0, %s69
      %s87 = sphi 0, %s87
      %s89 = sphi 0, %s87
      %s90 = sphi 0, %s89
      %s104 = sphi 0, %s90
      %s112 = sphi 0, %s114
      %s115 = sphi 0, %s112
      %s116 = sphi 0, %s115
      %s132 = sphi 0, %s116
      %s140 = sphi 0, %s142
      %s143 = sphi 0, %s140
      %s144 = sphi 0, %s143
      %s160 = sphi 0, %s144
      %s168 = sphi 0, %s170
      %s171 = sphi 0, %s168
      %s172 = sphi 0, %s171
      %s188 = sphi 0, %s172
    $region4: #{tpu_custom_call.1} parent=1 // loop_header_branch
      %21 = sbr.rel (%p19) target = $region8
    $region5: #{tpu_custom_call.1} parent=1 // loop_body
      %s23 = ssub.s32 %s18, 1
      %s24 = ssub.s32 %s18, 2
      %s31 = sadd.s32 1, %s26
      %p32 = scmp.ge.s32.totalorder %s31, 2
      %s33 = scalar_select %p32, 0, %s31
      %s34 = sadd.s32 1, %s25
      %s35 = scalar_select %p32, %s34, %s25
      %p36 = scmp.ge.s32.totalorder %s35, 2
      %s37 = scalar_select %p36, 0, %s35
      %s38 = ssub.s32 %s25, %s37
      %s39 = ssub.s32 %s26, %s33
      %s40 = sor.u32 %s38, %s39
      %p41 = scmp.eq.s32.totalorder %s40, 0
      %s43 = sadd.s32 %s42, 1
      %s44 = scalar_select %p41, %s42, %s43
      %p47 = pneg %p41
      %p48 = scmp.eq.s32.totalorder %s18, 3
      %p49 = por %p47, %p48
      %p50 = scmp.ne.s32.totalorder %s42, %s45
      %p51 = scmp.eq.s32.totalorder %s18, 0
      %p52 = por %p50, %p51
      %p53 = scmp.ne.s32.totalorder %s42, %s45
      %p54 = scmp.eq.s32.totalorder %s23, 3
      %p55 = por %p53, %p54
      %p56 = scmp.ne.s32.totalorder %s45, %s46
      %p57 = scmp.eq.s32.totalorder %s23, 0
      %p58 = por %p56, %p57
      %p59 = scmp.ne.s32.totalorder %s45, %s46
      %p60 = scmp.eq.s32.totalorder %s24, 3
      %p61 = por %p59, %p60
      %p63 = scmp.ne.s32.totalorder %s46, %s62
      %p64 = scmp.eq.s32.totalorder %s24, 0
      %p65 = por %p63, %p64
      %s67 = sadd.s32 %s66, 1
      %p70 = scmp.eq.s32.totalorder %s18, 3
      %p71 = scmp.ne.s32.totalorder %s66, %s68
      %p72 = scmp.eq.s32.totalorder %s18, 0
      %p73 = por %p71, %p72
      %p74 = scmp.ne.s32.totalorder %s66, %s68
      %p75 = scmp.eq.s32.totalorder %s23, 3
      %p76 = por %p74, %p75
      %p77 = scmp.ne.s32.totalorder %s68, %s69
      %p78 = scmp.eq.s32.totalorder %s23, 0
      %p79 = por %p77, %p78
      %p80 = scmp.ne.s32.totalorder %s68, %s69
      %p81 = scmp.eq.s32.totalorder %s24, 3
      %p82 = por %p80, %p81
      %p84 = scmp.ne.s32.totalorder %s69, %s83
      %p85 = scmp.eq.s32.totalorder %s24, 0
      %p86 = por %p84, %p85
      %s88 = sadd.s32 %s87, 1
      %p91 = scmp.eq.s32.totalorder %s18, 3
      %p92 = scmp.ne.s32.totalorder %s87, %s89
      %p93 = scmp.eq.s32.totalorder %s18, 0
      %p94 = por %p92, %p93
      %p95 = scmp.ne.s32.totalorder %s87, %s89
      %p96 = scmp.eq.s32.totalorder %s23, 3
      %p97 = por %p95, %p96
      %p98 = scmp.ne.s32.totalorder %s89, %s90
      %p99 = scmp.eq.s32.totalorder %s23, 0
      %p100 = por %p98, %p99
      %p101 = scmp.ne.s32.totalorder %s89, %s90
      %p102 = scmp.eq.s32.totalorder %s24, 3
      %p103 = por %p101, %p102
      %p105 = scmp.ne.s32.totalorder %s90, %s104
      %p106 = scmp.eq.s32.totalorder %s24, 0
      %p107 = por %p105, %p106
      %s108 = ssub.s32 %s25, %s37
      %s109 = ssub.s32 %s26, %s33
      %s110 = sor.u32 %s108, %s109
      %p111 = scmp.eq.s32.totalorder %s110, 0
      %s113 = sadd.s32 %s112, 1
      %s114 = scalar_select %p111, %s112, %s113
      %p117 = pneg %p111
      %p118 = scmp.eq.s32.totalorder %s18, 3
      %p119 = por %p117, %p118
      %p120 = scmp.ne.s32.totalorder %s112, %s115
      %p121 = scmp.eq.s32.totalorder %s18, 0
      %p122 = por %p120, %p121
      %p123 = scmp.ne.s32.totalorder %s112, %s115
      %p124 = scmp.eq.s32.totalorder %s23, 3
      %p125 = por %p123, %p124
      %p126 = scmp.ne.s32.totalorder %s115, %s116
      %p127 = scmp.eq.s32.totalorder %s23, 0
      %p128 = por %p126, %p127
      %p129 = scmp.ne.s32.totalorder %s115, %s116
      %p130 = scmp.eq.s32.totalorder %s24, 3
      %p131 = por %p129, %p130
      %p133 = scmp.ne.s32.totalorder %s116, %s132
      %p134 = scmp.eq.s32.totalorder %s24, 0
      %p135 = por %p133, %p134
      %s136 = ssub.s32 %s25, %s37
      %s137 = ssub.s32 %s26, %s33
      %s138 = sor.u32 %s136, %s137
      %p139 = scmp.eq.s32.totalorder %s138, 0
      %s141 = sadd.s32 %s140, 1
      %s142 = scalar_select %p139, %s140, %s141
      %p145 = pneg %p139
      %p146 = scmp.eq.s32.totalorder %s18, 3
      %p147 = por %p145, %p146
      %p148 = scmp.ne.s32.totalorder %s140, %s143
      %p149 = scmp.eq.s32.totalorder %s18, 0
      %p150 = por %p148, %p149
      %p151 = scmp.ne.s32.totalorder %s140, %s143
      %p152 = scmp.eq.s32.totalorder %s23, 3
      %p153 = por %p151, %p152
      %p154 = scmp.ne.s32.totalorder %s143, %s144
      %p155 = scmp.eq.s32.totalorder %s23, 0
      %p156 = por %p154, %p155
      %p157 = scmp.ne.s32.totalorder %s143, %s144
      %p158 = scmp.eq.s32.totalorder %s24, 3
      %p159 = por %p157, %p158
      %p161 = scmp.ne.s32.totalorder %s144, %s160
      %p162 = scmp.eq.s32.totalorder %s24, 0
      %p163 = por %p161, %p162
      %s164 = ssub.s32 %s25, %s37
      %s165 = ssub.s32 %s26, %s33
      %s166 = sor.u32 %s164, %s165
      %p167 = scmp.eq.s32.totalorder %s166, 0
      %s169 = sadd.s32 %s168, 1
      %s170 = scalar_select %p167, %s168, %s169
      %p173 = pneg %p167
      %p174 = scmp.eq.s32.totalorder %s18, 3
      %p175 = por %p173, %p174
      %p176 = scmp.ne.s32.totalorder %s168, %s171
      %p177 = scmp.eq.s32.totalorder %s18, 0
      %p178 = por %p176, %p177
      %p179 = scmp.ne.s32.totalorder %s168, %s171
      %p180 = scmp.eq.s32.totalorder %s23, 3
      %p181 = por %p179, %p180
      %p182 = scmp.ne.s32.totalorder %s171, %s172
      %p183 = scmp.eq.s32.totalorder %s23, 0
      %p184 = por %p182, %p183
      %p185 = scmp.ne.s32.totalorder %s171, %s172
      %p186 = scmp.eq.s32.totalorder %s24, 3
      %p187 = por %p185, %p186
      %p189 = scmp.ne.s32.totalorder %s172, %s188
      %p190 = scmp.eq.s32.totalorder %s24, 0
      %p191 = por %p189, %p190
      %p192 = scmp.le.s32.totalorder 1, %s18
      %p193 = scmp.lt.s32.totalorder %s18, 5
      %p194 = pnand %p192, %p193
      %p195 = pneg %p194
      // Predicated region
      $region9: #{tpu_custom_call.1} parent=5 // pred_check
        _
      $region10: #{tpu_custom_call.1} parent=5 // pred_check_branch
        %197 = sbr.rel (%p194) target = $region12
      $region11: #{tpu_custom_call.1} parent=5 // pred_region
        %s198 = ssub.s32 %s18, 1
        // Predicated region
        $region13: #{tpu_custom_call.1} parent=11 // pred_check
          %p199 = pneg %p79
        $region14: #{tpu_custom_call.1} parent=11 // pred_check_branch
          %201 = sbr.rel (%p199) target = $region16
        $region15: #{tpu_custom_call.1} parent=11 // pred_region
          _
        $region16: #{tpu_custom_call.1} parent=11 // pred_fallthru
          _
        // Predicated region
        $region17: #{tpu_custom_call.1} parent=11 // pred_check
          %p202 = pneg %p100
        $region18: #{tpu_custom_call.1} parent=11 // pred_check_branch
          %204 = sbr.rel (%p202) target = $region20
        $region19: #{tpu_custom_call.1} parent=11 // pred_region
          _
        $region20: #{tpu_custom_call.1} parent=11 // pred_fallthru
          _
      $region12: #{tpu_custom_call.1} parent=5 // pred_fallthru
        _
      %p205 = scmp.lt.s32.totalorder %s18, 4
      // Predicated region
      $region21: #{tpu_custom_call.1} parent=5 // pred_check
        %p206 = pneg %p205
      $region22: #{tpu_custom_call.1} parent=5 // pred_check_branch
        %208 = sbr.rel (%p206) target = $region24
      $region23: #{tpu_custom_call.1} parent=5 // pred_region
        // Predicated region
        $region25: #{tpu_custom_call.1} parent=23 // pred_check
          %p209 = pneg %p52
        $region26: #{tpu_custom_call.1} parent=23 // pred_check_branch
          %211 = sbr.rel (%p209) target = $region28
        $region27: #{tpu_custom_call.1} parent=23 // pred_region
          %p212 = scmp.lt.s32.totalorder %s25, 1
          %s213 = scalar_select %p212, %s25, 1
          %p214 = scmp.lt.s32.totalorder %s26, 1
          %s215 = scalar_select %p214, %s26, 1
          %s216 = smul.addr %s213, 2
          %s217 = sadd.s32 %s215, %s216
          %s218 = smul.addr %s217, 4
          %s219 = scalar_lea.vmem %s0, %s218
        $region28: #{tpu_custom_call.1} parent=23 // pred_fallthru
          _
      $region24: #{tpu_custom_call.1} parent=5 // pred_fallthru
        _
      %p220 = scmp.le.s32.totalorder 1, %s18
      %p221 = scmp.lt.s32.totalorder %s18, 5
      %p222 = pnand %p220, %p221
      %p223 = pneg %p222
      // Predicated region
      $region29: #{tpu_custom_call.1} parent=5 // pred_check
        _
      $region30: #{tpu_custom_call.1} parent=5 // pred_check_branch
        %225 = sbr.rel (%p222) target = $region32
      $region31: #{tpu_custom_call.1} parent=5 // pred_region
        %s226 = ssub.s32 %s18, 1
        %p227 = scmp.lt.s32.totalorder %s27, 1
        %s228 = scalar_select %p227, %s27, 1
        %p229 = scmp.lt.s32.totalorder %s28, 1
        %s230 = scalar_select %p229, %s28, 1
        %s231 = smul.addr %s228, 2
        %s232 = sadd.s32 %s230, %s231
        %s233 = smul.addr %s232, 4
        %s234 = scalar_lea.vmem %s0, %s233
        %p235 = pneg %p58
        %p236 = pneg %p55
        %p237 = pneg %p79
        %p238 = pneg %p76
        %p239 = pneg %p100
        %p240 = pneg %p97
        %p241 = pneg %p128
        %p242 = pneg %p125
        %s243 = sand.u32 %s115, 1
        %s244 = scalar_lea.sflag [#allocation3], %s243
        %s245 = sand.u32 %s115, 1
        %s246 = smul.addr %s245, 2
        %s247 = scalar_lea.vmem [#allocation2], %s246
        %p248 = pneg %p156
        %p249 = pneg %p153
        %s250 = sand.u32 %s23, 1
        %s251 = scalar_lea.sflag [#allocation5], %s250
        %s252 = sand.u32 %s143, 1
        %s253 = smul.addr %s252, 2
        %s254 = scalar_lea.vmem [#allocation4], %s253
        %p255 = pneg %p184
        %p256 = pneg %p181
        %s257 = sand.u32 %s23, 1
        %s258 = scalar_lea.sflag [#allocation5], %s257
        %s259 = sand.u32 %s171, 1
        %s260 = smul.addr %s259, 2
        %s261 = scalar_lea.vmem [#allocation6], %s260
        %p262 = scmp.lt.s32.totalorder %s27, 1
        %s263 = scalar_select %p262, %s27, 1
        %p264 = scmp.lt.s32.totalorder %s28, 1
        %s265 = scalar_select %p264, %s28, 1
        %s266 = smul.addr %s263, 2
        %s267 = sadd.s32 %s265, %s266
        %s268 = smul.addr %s267, 4
        %s269 = scalar_lea.vmem %s0, %s268
        %v271 = vld [vmem:[%s269] sm:$0xf]
        %v272 = vpack.c.bf16 %v271, %v271
        %v273 = vld [vmem:[%s1] sm:$0xf]
        %v274 = vld [vmem:[%s1 + $0x4] sm:$0x3]
        %v275 = vld [vmem:[%s2] sm:$0xff]
        %v276 = vld [vmem:[%s2 + $0x8] sm:$0xf]
        %278 = vset.pattern.permute.xlu0 0
        %279 = vperm.xlu0 %278, %v275
        %v280 = vpop.permute.xlu0 %279
        %283 = vset.pattern.permute.xlu0 0
        %284 = vperm.xlu0 %283, %v276
        %v285 = vpop.permute.xlu0 %284
        %v289 = vunpack.c.l.b16 %v273
        %v290 = vunpack.c.l.b16 %v274
        %v291 = vpack.c.b16 %v290, %v289
        %vm292 = vcmask 31744
        %v294 = vsel %vm292, %v291, 0
        %vm296 = vcmask 1041408
        %v298 = vsel %vm296, %v272, 0
        %300 = vmatprep.subr.bf16.mxu0 0
        %301 = vmatpush1.bf16.msra.mxu0 0
        %302 = vmatprep.subr.bf16.mxu0 0
        %303 = vmatpush1.bf16.msra.mxu0 0
        %304 = vmatprep.subr.bf16.mxu0 0
        %305 = vmatpush1.bf16.msra.mxu0 0
        %306 = vmatprep.subr.bf16.mxu0 0
        %307 = vmatpush1.bf16.msra.mxu0 0
        %308 = vmatprep.subr.bf16.mxu0 0
        %309 = vmatpush1.bf16.msra.mxu0 0
        %310 = vmatprep.subr.bf16.mxu0 0
        %311 = vmatpush1.bf16.msra.mxu0 0
        %312 = vmatprep.subr.bf16.mxu0 0
        %313 = vmatpush1.bf16.msra.mxu0 0
        %314 = vmatprep.subr.bf16.mxu0 0
        %315 = vmatpush1.bf16.msra.mxu0 %v298
        %316 = vmatprep.subr.bf16.mxu0 0
        %317 = vmatpush2.bf16.msra.mxu0 0
        %318 = vmatprep.subr.bf16.mxu0 0
        %319 = vmatpush2.bf16.msra.mxu0 0
        %320 = vmatprep.subr.bf16.mxu0 0
        %321 = vmatpush2.bf16.msra.mxu0 0
        %322 = vmatprep.subr.bf16.mxu0 0
        %323 = vmatpush2.bf16.msra.mxu0 0
        %324 = vmatprep.subr.bf16.mxu0 0
        %325 = vmatpush2.bf16.msra.mxu0 0
        %326 = vmatprep.subr.bf16.mxu0 0
        %327 = vmatpush2.bf16.msra.mxu0 0
        %328 = vmatprep.subr.bf16.mxu0 0
        %329 = vmatpush2.bf16.msra.mxu0 0
        %330 = vmatprep.subr.bf16.mxu0 0
        %331 = vmatpush2.bf16.msra.mxu0 0
        %332 = vmatprep.mubr.bf16.mxu0 0
        %333 = vmatmul.mubr.bf16.gmra.mxu0 %v294
        %v334 = vpop.f32.mrf.mxu0
        %v335 = vadd.f32 %v280, %v334
        %v336 = vpop.f32.mrf.mxu0
        %v337 = vpop.f32.mrf.mxu0
        %v338 = vadd.f32 %v285, %v337
        %v339 = vpop.f32.mrf.mxu0
        %340 = vdwg.mxu0
        %v341 = vpack.c.bf16 %v335, %v335
        %342 = vst [vmem:[%s247] sm:$0x3] %v341
        %v345 = vunpack.c.l.s4 1983009808
        %v346 = vunpack.c.0.s8 %v345
        %v347 = vlaneseq
        %v348 = vshrl.u32 %v347, 7
        %v349 = vsub.s32 %v346, %v348
        %v350 = vrot.slane %v341, %v349
        %v351 = vcombine.high %v350, %v350
        %353 = vst [vmem:[%s254] sm:$0x3] %v351
        %v354 = vpack.c.bf16 %v338, %v338
        %355 = vst [vmem:[%s261] sm:$0x3] %v354
        %s356 = sand.u32 %s115, 1
        %s357 = scalar_lea.sflag [#allocation3], %s356
        %s358 = sand.u32 %s115, 1
        %s359 = smul.addr %s358, 2
        %s360 = scalar_lea.vmem [#allocation2], %s359
        %s361 = sand.u32 %s23, 1
        %s362 = scalar_lea.sflag [#allocation5], %s361
        %s363 = sand.u32 %s143, 1
        %s364 = smul.addr %s363, 2
        %s365 = scalar_lea.vmem [#allocation4], %s364
        %s366 = sand.u32 %s23, 1
        %s367 = scalar_lea.sflag [#allocation5], %s366
        %s368 = sand.u32 %s171, 1
        %s369 = smul.addr %s368, 2
        %s370 = scalar_lea.vmem [#allocation6], %s369
        // Predicated region
        $region33: #{tpu_custom_call.1} parent=31 // pred_check
          %p371 = pneg %p125
        $region34: #{tpu_custom_call.1} parent=31 // pred_check_branch
          %373 = sbr.rel (%p371) target = $region36
        $region35: #{tpu_custom_call.1} parent=31 // pred_region
          %s375 = ssub.s32 32, 32
          %376 = vsyncadd %s357, %s375
          %s377 = smul.addr %s27, 2
          %s378 = sadd.s32 %s28, %s377
          %s379 = smul.addr %s378, 32
          %s380 = scalar_lea.hbm %s3, %s379
          %s382 = sshll.u32 %s360, 4
          %s383 = int_to_ptr.vmem [resolvable:$true] %s382
          %385 = dma.vmem_to_hbm [thread:$0]  %s383, 32, %s380, %s357
        $region36: #{tpu_custom_call.1} parent=31 // pred_fallthru
          _
        // Predicated region
        $region37: #{tpu_custom_call.1} parent=31 // pred_check
          %p386 = pneg %p153
        $region38: #{tpu_custom_call.1} parent=31 // pred_check_branch
          %388 = sbr.rel (%p386) target = $region40
        $region39: #{tpu_custom_call.1} parent=31 // pred_region
          %s390 = ssub.s32 32, 32
          %391 = vsyncadd %s362, %s390
          %s392 = smul.addr %s27, 2
          %s393 = sadd.s32 %s28, %s392
          %s394 = smul.addr %s393, 32
          %s395 = scalar_lea.hbm %s4, %s394
          %s397 = sshll.u32 %s365, 4
          %s398 = int_to_ptr.vmem [resolvable:$true] %s397
          %400 = dma.vmem_to_hbm [thread:$0]  %s398, 32, %s395, %s362
        $region40: #{tpu_custom_call.1} parent=31 // pred_fallthru
          _
        // Predicated region
        $region41: #{tpu_custom_call.1} parent=31 // pred_check
          %p401 = pneg %p181
        $region42: #{tpu_custom_call.1} parent=31 // pred_check_branch
          %403 = sbr.rel (%p401) target = $region44
        $region43: #{tpu_custom_call.1} parent=31 // pred_region
          %s405 = ssub.s32 32, 32
          %406 = vsyncadd %s367, %s405
          %s407 = smul.addr %s27, 2
          %s408 = sadd.s32 %s28, %s407
          %s409 = smul.addr %s408, 32
          %s410 = scalar_lea.hbm %s5, %s409
          %s412 = sshll.u32 %s370, 4
          %s413 = int_to_ptr.vmem [resolvable:$true] %s412
          %415 = dma.vmem_to_hbm [thread:$0]  %s413, 32, %s410, %s367
        $region44: #{tpu_custom_call.1} parent=31 // pred_fallthru
          _
      $region32: #{tpu_custom_call.1} parent=5 // pred_fallthru
        _
      %p416 = scmp.le.s32.totalorder 2, %s18
      // Predicated region
      $region45: #{tpu_custom_call.1} parent=5 // pred_check
        %p417 = pneg %p416
      $region46: #{tpu_custom_call.1} parent=5 // pred_check_branch
        %419 = sbr.rel (%p417) target = $region48
      $region47: #{tpu_custom_call.1} parent=5 // pred_region
        %s420 = ssub.s32 %s18, 2
        // Predicated region
        $region49: #{tpu_custom_call.1} parent=47 // pred_check
          %p421 = pneg %p131
        $region50: #{tpu_custom_call.1} parent=47 // pred_check_branch
          %423 = sbr.rel (%p421) target = $region52
        $region51: #{tpu_custom_call.1} parent=47 // pred_region
          %s424 = sand.u32 %s116, 1
          %s425 = scalar_lea.sflag [#allocation3], %s424
          %s426 = sand.u32 %s116, 1
          %s427 = smul.addr %s426, 2
          %s428 = scalar_lea.vmem [#allocation2], %s427
          %429 = dma.done %s425, 32
        $region52: #{tpu_custom_call.1} parent=47 // pred_fallthru
          _
        // Predicated region
        $region53: #{tpu_custom_call.1} parent=47 // pred_check
          %p430 = pneg %p159
        $region54: #{tpu_custom_call.1} parent=47 // pred_check_branch
          %432 = sbr.rel (%p430) target = $region56
        $region55: #{tpu_custom_call.1} parent=47 // pred_region
          %s433 = sand.u32 %s24, 1
          %s434 = scalar_lea.sflag [#allocation5], %s433
          %s435 = sand.u32 %s144, 1
          %s436 = smul.addr %s435, 2
          %s437 = scalar_lea.vmem [#allocation4], %s436
          %438 = dma.done %s434, 32
        $region56: #{tpu_custom_call.1} parent=47 // pred_fallthru
          _
        // Predicated region
        $region57: #{tpu_custom_call.1} parent=47 // pred_check
          %p439 = pneg %p187
        $region58: #{tpu_custom_call.1} parent=47 // pred_check_branch
          %441 = sbr.rel (%p439) target = $region60
        $region59: #{tpu_custom_call.1} parent=47 // pred_region
          %s442 = sand.u32 %s24, 1
          %s443 = scalar_lea.sflag [#allocation5], %s442
          %s444 = sand.u32 %s172, 1
          %s445 = smul.addr %s444, 2
          %s446 = scalar_lea.vmem [#allocation6], %s445
          %447 = dma.done %s443, 32
        $region60: #{tpu_custom_call.1} parent=47 // pred_fallthru
          _
      $region48: #{tpu_custom_call.1} parent=5 // pred_fallthru
        _
    $region6: #{tpu_custom_call.1} parent=1 // loop_footer
      %s22 = sadd.s32 1, %s18
    $region7: #{tpu_custom_call.1} parent=1 // loop_footer_branch
      %17 = sbr.rel target = $region3
    $region8: #{tpu_custom_call.1} parent=1 // loop_exit
      _
    %448 = vsyncpa [#allocation3], 1
    %s449 = scalar_lea.sflag [#allocation3], 1
    %450 = vsyncpa %s449, 1
    %451 = vsyncpa [#allocation5], 1
    %s452 = scalar_lea.sflag [#allocation5], 1
    %453 = vsyncpa %s452, 1

</llo_original>
